<compile_context>
chip_gen: v7x
topology: tpu7x:2x2x1
jax: 0.10.0
libtpu: 0.0.40
codegen_flags: <defaults>
</compile_context>

<pallas_src>
import functools

import jax
import jax.numpy as jnp
from jax.experimental import pallas as pl
from jax.experimental.pallas import tpu as pltpu


def _round_up(n: int, m: int) -> int:
    return (n + m - 1) // m * m


def mlp_kernel(x_ref, w0_ref, b0_ref, w1_ref, b1_ref, w2_ref, b2_ref,
               wo_ref, bo_ref, out_ref):
    cd = w1_ref.dtype  # compute (matmul-input) dtype, e.g. bfloat16

    # Layer 0: Linear(input_dim -> hidden) + ReLU  (K padded to 128-multiple)
    h = jnp.dot(x_ref[...], w0_ref[...],
                preferred_element_type=jnp.float32) + b0_ref[...]
    h = jnp.maximum(h, 0.0)

    # Layer 1: Linear(hidden -> hidden) + ReLU
    h = jnp.dot(h.astype(cd), w1_ref[...],
                preferred_element_type=jnp.float32) + b1_ref[...]
    h = jnp.maximum(h, 0.0)

    # Layer 2: Linear(hidden -> hidden) + ReLU
    h = jnp.dot(h.astype(cd), w2_ref[...],
                preferred_element_type=jnp.float32) + b2_ref[...]
    h = jnp.maximum(h, 0.0)

    # fc_out: Linear(hidden -> output_dim), no activation (N padded to 128)
    out = jnp.dot(h.astype(cd), wo_ref[...],
                  preferred_element_type=jnp.float32) + bo_ref[...]
    out_ref[...] = out.astype(out_ref.dtype)
    # TODO(synk): dropout>0 / use_layer_norm=True branches are nn.Identity in
    # the default config; if enabled, LayerNorm would add a per-row mean/var
    # reduction (VPU/XLU) between the ReLU and the next matmul.


@functools.partial(jax.jit, static_argnames=("compute_dtype", "block_m"))
def enhanced_prediction_mlp(x, params, *, compute_dtype=jnp.bfloat16,
                            block_m=512):
    """x: [B, input_dim] float32. params: dict of weights/biases (see init)."""
    B, in_dim = x.shape
    hidden = params["w0"].shape[1]
    out_dim = params["wo"].shape[1]

    # Lane-dense padded dims (zeros are exact for matmul / ReLU).
    K0 = _round_up(in_dim, 128)
    H = _round_up(hidden, 128)
    NO = _round_up(out_dim, 128)

    # Batch tile: multiple of 8 sublanes, capped by block_m.
    tm = max(8, min(block_m, _round_up(B, 8)))
    b_pad = _round_up(B, tm)
    grid_m = pl.cdiv(b_pad, tm)

    def pad_to(a, shape):
        return jnp.pad(a, [(0, t - s) for s, t in zip(a.shape, shape)])

    cd = compute_dtype
    x_p = pad_to(x, (b_pad, K0)).astype(cd)
    w0 = pad_to(params["w0"], (K0, H)).astype(cd)
    w1 = pad_to(params["w1"], (H, H)).astype(cd)
    w2 = pad_to(params["w2"], (H, H)).astype(cd)
    wo = pad_to(params["wo"], (H, NO)).astype(cd)
    # Biases stay f32 (bias add + ReLU run on the f32 accumulator).
    b0 = pad_to(params["b0"], (1, H)).astype(jnp.float32)
    b1 = pad_to(params["b1"], (1, H)).astype(jnp.float32)
    b2 = pad_to(params["b2"], (1, H)).astype(jnp.float32)
    bo = pad_to(params["bo"], (1, NO)).astype(jnp.float32)

    resident = lambda shape: pl.BlockSpec(shape, lambda i: (0, 0))

    out_padded = pl.pallas_call(
        mlp_kernel,
        out_shape=jax.ShapeDtypeStruct((b_pad, NO), x.dtype),
        grid=(grid_m,),
        in_specs=[
            pl.BlockSpec((tm, K0), lambda i: (i, 0)),   # x: tiled over batch
            resident(w0.shape), resident(b0.shape),     # weights: VMEM-resident
            resident(w1.shape), resident(b1.shape),
            resident(w2.shape), resident(b2.shape),
            resident(wo.shape), resident(bo.shape),
        ],
        out_specs=pl.BlockSpec((tm, NO), lambda i: (i, 0)),
        compiler_params=pltpu.CompilerParams(
            dimension_semantics=("parallel",),          # megacore on v7x
            vmem_limit_bytes=64 * 1024 * 1024,
        ),
    )(x_p, w0, b0, w1, b1, w2, b2, wo, bo)

    return out_padded[:B, :out_dim]


def init_params(key, input_dim, hidden_dim, output_dim):
    """Deterministic init mimicking nn.Linear's uniform(-1/sqrt(fan_in), ...)."""
    def linear(k, fan_in, fan_out):
        kw, kb = jax.random.split(k)
        bound = 1.0 / jnp.sqrt(fan_in)
        w = jax.random.uniform(kw, (fan_in, fan_out), jnp.float32, -bound, bound)
        b = jax.random.uniform(kb, (1, fan_out), jnp.float32, -bound, bound)
        return w, b

    k0, k1, k2, ko = jax.random.split(key, 4)
    w0, b0 = linear(k0, input_dim, hidden_dim)
    w1, b1 = linear(k1, hidden_dim, hidden_dim)
    w2, b2 = linear(k2, hidden_dim, hidden_dim)
    wo, bo = linear(ko, hidden_dim, output_dim)
    return dict(w0=w0, b0=b0, w1=w1, b1=b1, w2=w2, b2=b2, wo=wo, bo=bo)


def reference_forward(x, p, compute_dtype=jnp.bfloat16):
    """Mixed-precision JAX reference matching the kernel's numerics."""
    cd = compute_dtype

    def lin(h, w, b):
        return jnp.dot(h.astype(cd), w.astype(cd),
                       preferred_element_type=jnp.float32) + b

    h = jnp.maximum(lin(x, p["w0"], p["b0"]), 0.0)
    h = jnp.maximum(lin(h, p["w1"], p["b1"]), 0.0)
    h = jnp.maximum(lin(h, p["w2"], p["b2"]), 0.0)
    return lin(h, p["wo"], p["bo"])


if __name__ == "__main__":
    input_dim, hidden_dim, output_dim = 32, 128, 1
    batch = 8

    key = jax.random.PRNGKey(0)
    kx, kp = jax.random.split(key)
    x = jax.random.normal(kx, (batch, input_dim), jnp.float32)
    params = init_params(kp, input_dim, hidden_dim, output_dim)

    out = enhanced_prediction_mlp(x, params)
    out = jax.block_until_ready(out)

    ref_bf16 = reference_forward(x, params, jnp.bfloat16)
    ref_f32 = reference_forward(x, params, jnp.float32)

    assert out.shape == (batch, output_dim)
    # Tight check vs matched mixed-precision reference.
    assert jnp.allclose(out, ref_bf16, atol=2e-2, rtol=2e-2), \
        "mismatch vs matched-precision JAX reference"
    # Loose sanity check vs full-f32 reference.
    assert jnp.allclose(out, ref_f32, atol=1e-1, rtol=1e-1), \
        "mismatch vs f32 JAX reference"

    print("KERNEL_OK")
</pallas_src>

<mosaic_0001>
module attributes {stable_mosaic.version = 11 : i64} {
  func.func @mlp_kernel(%arg0: i32, %arg1: memref<8x128xbf16, #tpu.memory_space<vmem>>, %arg2: memref<128x128xbf16, #tpu.memory_space<vmem>>, %arg3: memref<1x128xf32, #tpu.memory_space<vmem>>, %arg4: memref<128x128xbf16, #tpu.memory_space<vmem>>, %arg5: memref<1x128xf32, #tpu.memory_space<vmem>>, %arg6: memref<128x128xbf16, #tpu.memory_space<vmem>>, %arg7: memref<1x128xf32, #tpu.memory_space<vmem>>, %arg8: memref<128x128xbf16, #tpu.memory_space<vmem>>, %arg9: memref<1x128xf32, #tpu.memory_space<vmem>>, %arg10: memref<8x128xf32, #tpu.memory_space<vmem>>) attributes {dimension_semantics = [#tpu.dimension_semantics<parallel>], iteration_bounds = array<i64: 1>, scalar_prefetch = 0 : i64, scratch_operands = 0 : i64, tpu.core_type = #tpu.core_type<tc>, window_params = [{transform_indices = @transform_0, window_bounds = array<i64: 8, 128>}, {pipeline_mode = #tpu.pipeline_mode<synchronous>, transform_indices = @transform_1, window_bounds = array<i64: 128, 128>}, {pipeline_mode = #tpu.pipeline_mode<synchronous>, transform_indices = @transform_2, window_bounds = array<i64: 1, 128>}, {pipeline_mode = #tpu.pipeline_mode<synchronous>, transform_indices = @transform_3, window_bounds = array<i64: 128, 128>}, {pipeline_mode = #tpu.pipeline_mode<synchronous>, transform_indices = @transform_4, window_bounds = array<i64: 1, 128>}, {pipeline_mode = #tpu.pipeline_mode<synchronous>, transform_indices = @transform_5, window_bounds = array<i64: 128, 128>}, {pipeline_mode = #tpu.pipeline_mode<synchronous>, transform_indices = @transform_6, window_bounds = array<i64: 1, 128>}, {pipeline_mode = #tpu.pipeline_mode<synchronous>, transform_indices = @transform_7, window_bounds = array<i64: 128, 128>}, {pipeline_mode = #tpu.pipeline_mode<synchronous>, transform_indices = @transform_8, window_bounds = array<i64: 1, 128>}, {transform_indices = @transform_9, window_bounds = array<i64: 8, 128>}]} {
    %c0 = arith.constant 0 : index
    %c0_0 = arith.constant 0 : index
    %0 = vector.load %arg1[%c0, %c0_0] : memref<8x128xbf16, #tpu.memory_space<vmem>>, vector<8x128xbf16>
    %c0_1 = arith.constant 0 : index
    %c0_2 = arith.constant 0 : index
    %1 = vector.load %arg2[%c0_1, %c0_2] : memref<128x128xbf16, #tpu.memory_space<vmem>>, vector<128x128xbf16>
    %cst = arith.constant dense<0.000000e+00> : vector<8x128xf32>
    %2 = tpu.matmul %0, %1, %cst {dimension_numbers = #tpu.dot_dimension_numbers<[1], [0], [0], [1], [0, 0, 1, 1], [], []>} : vector<8x128xbf16>, vector<128x128xbf16>, vector<8x128xf32> -> vector<8x128xf32>
    %c0_3 = arith.constant 0 : index
    %c0_4 = arith.constant 0 : index
    %3 = vector.load %arg3[%c0_3, %c0_4] : memref<1x128xf32, #tpu.memory_space<vmem>>, vector<1x128xf32>
    %4 = vector.broadcast %3 : vector<1x128xf32> to vector<8x128xf32>
    %5 = arith.addf %2, %4 : vector<8x128xf32>
    %cst_5 = arith.constant 0.000000e+00 : f32
    %6 = vector.broadcast %cst_5 : f32 to vector<8x128xf32>
    %7 = arith.maximumf %5, %6 : vector<8x128xf32>
    %8 = arith.truncf %7 : vector<8x128xf32> to vector<8x128xbf16>
    %c0_6 = arith.constant 0 : index
    %c0_7 = arith.constant 0 : index
    %9 = vector.load %arg4[%c0_6, %c0_7] : memref<128x128xbf16, #tpu.memory_space<vmem>>, vector<128x128xbf16>
    %cst_8 = arith.constant dense<0.000000e+00> : vector<8x128xf32>
    %10 = tpu.matmul %8, %9, %cst_8 {dimension_numbers = #tpu.dot_dimension_numbers<[1], [0], [0], [1], [0, 0, 1, 1], [], []>} : vector<8x128xbf16>, vector<128x128xbf16>, vector<8x128xf32> -> vector<8x128xf32>
    %c0_9 = arith.constant 0 : index
    %c0_10 = arith.constant 0 : index
    %11 = vector.load %arg5[%c0_9, %c0_10] : memref<1x128xf32, #tpu.memory_space<vmem>>, vector<1x128xf32>
    %12 = vector.broadcast %11 : vector<1x128xf32> to vector<8x128xf32>
    %13 = arith.addf %10, %12 : vector<8x128xf32>
    %cst_11 = arith.constant 0.000000e+00 : f32
    %14 = vector.broadcast %cst_11 : f32 to vector<8x128xf32>
    %15 = arith.maximumf %13, %14 : vector<8x128xf32>
    %16 = arith.truncf %15 : vector<8x128xf32> to vector<8x128xbf16>
    %c0_12 = arith.constant 0 : index
    %c0_13 = arith.constant 0 : index
    %17 = vector.load %arg6[%c0_12, %c0_13] : memref<128x128xbf16, #tpu.memory_space<vmem>>, vector<128x128xbf16>
    %cst_14 = arith.constant dense<0.000000e+00> : vector<8x128xf32>
    %18 = tpu.matmul %16, %17, %cst_14 {dimension_numbers = #tpu.dot_dimension_numbers<[1], [0], [0], [1], [0, 0, 1, 1], [], []>} : vector<8x128xbf16>, vector<128x128xbf16>, vector<8x128xf32> -> vector<8x128xf32>
    %c0_15 = arith.constant 0 : index
    %c0_16 = arith.constant 0 : index
    %19 = vector.load %arg7[%c0_15, %c0_16] : memref<1x128xf32, #tpu.memory_space<vmem>>, vector<1x128xf32>
    %20 = vector.broadcast %19 : vector<1x128xf32> to vector<8x128xf32>
    %21 = arith.addf %18, %20 : vector<8x128xf32>
    %cst_17 = arith.constant 0.000000e+00 : f32
    %22 = vector.broadcast %cst_17 : f32 to vector<8x128xf32>
    %23 = arith.maximumf %21, %22 : vector<8x128xf32>
    %24 = arith.truncf %23 : vector<8x128xf32> to vector<8x128xbf16>
    %c0_18 = arith.constant 0 : index
    %c0_19 = arith.constant 0 : index
    %25 = vector.load %arg8[%c0_18, %c0_19] : memref<128x128xbf16, #tpu.memory_space<vmem>>, vector<128x128xbf16>
    %cst_20 = arith.constant dense<0.000000e+00> : vector<8x128xf32>
    %26 = tpu.matmul %24, %25, %cst_20 {dimension_numbers = #tpu.dot_dimension_numbers<[1], [0], [0], [1], [0, 0, 1, 1], [], []>} : vector<8x128xbf16>, vector<128x128xbf16>, vector<8x128xf32> -> vector<8x128xf32>
    %c0_21 = arith.constant 0 : index
    %c0_22 = arith.constant 0 : index
    %27 = vector.load %arg9[%c0_21, %c0_22] : memref<1x128xf32, #tpu.memory_space<vmem>>, vector<1x128xf32>
    %28 = vector.broadcast %27 : vector<1x128xf32> to vector<8x128xf32>
    %29 = arith.addf %26, %28 : vector<8x128xf32>
    %c0_23 = arith.constant 0 : index
    %c0_24 = arith.constant 0 : index
    %30 = vector.load %arg10[%c0_23, %c0_24] : memref<8x128xf32, #tpu.memory_space<vmem>>, vector<8x128xf32>
    tpu.vector_store %arg10[%c0_23, %c0_24], %29 {strides = array<i32>} : memref<8x128xf32, #tpu.memory_space<vmem>>, vector<8x128xf32>,
    return
  }
  func.func @transform_0(%arg0: i32) -> (i32, i32) {
    %c0_i32 = arith.constant 0 : i32
    %c0_i32_0 = arith.constant 0 : i32
    return %arg0, %c0_i32 : i32, i32
  }
  func.func @transform_1(%arg0: i32) -> (i32, i32) {
    %c0_i32 = arith.constant 0 : i32
    %c0_i32_0 = arith.constant 0 : i32
    %c0_i32_1 = arith.constant 0 : i32
    return %c0_i32, %c0_i32_0 : i32, i32
  }
  func.func @transform_2(%arg0: i32) -> (i32, i32) {
    %c0_i32 = arith.constant 0 : i32
    %c0_i32_0 = arith.constant 0 : i32
    %c0_i32_1 = arith.constant 0 : i32
    return %c0_i32, %c0_i32_0 : i32, i32
  }
  func.func @transform_3(%arg0: i32) -> (i32, i32) {
    %c0_i32 = arith.constant 0 : i32
    %c0_i32_0 = arith.constant 0 : i32
    %c0_i32_1 = arith.constant 0 : i32
    return %c0_i32, %c0_i32_0 : i32, i32
  }
  func.func @transform_4(%arg0: i32) -> (i32, i32) {
    %c0_i32 = arith.constant 0 : i32
    %c0_i32_0 = arith.constant 0 : i32
    %c0_i32_1 = arith.constant 0 : i32
    return %c0_i32, %c0_i32_0 : i32, i32
  }
  func.func @transform_5(%arg0: i32) -> (i32, i32) {
    %c0_i32 = arith.constant 0 : i32
    %c0_i32_0 = arith.constant 0 : i32
    %c0_i32_1 = arith.constant 0 : i32
    return %c0_i32, %c0_i32_0 : i32, i32
  }
  func.func @transform_6(%arg0: i32) -> (i32, i32) {
    %c0_i32 = arith.constant 0 : i32
    %c0_i32_0 = arith.constant 0 : i32
    %c0_i32_1 = arith.constant 0 : i32
    return %c0_i32, %c0_i32_0 : i32, i32
  }
  func.func @transform_7(%arg0: i32) -> (i32, i32) {
    %c0_i32 = arith.constant 0 : i32
    %c0_i32_0 = arith.constant 0 : i32
    %c0_i32_1 = arith.constant 0 : i32
    return %c0_i32, %c0_i32_0 : i32, i32
  }
  func.func @transform_8(%arg0: i32) -> (i32, i32) {
    %c0_i32 = arith.constant 0 : i32
    %c0_i32_0 = arith.constant 0 : i32
    %c0_i32_1 = arith.constant 0 : i32
    return %c0_i32, %c0_i32_0 : i32, i32
  }
  func.func @transform_9(%arg0: i32) -> (i32, i32) {
    %c0_i32 = arith.constant 0 : i32
    %c0_i32_0 = arith.constant 0 : i32
    return %arg0, %c0_i32 : i32, i32
  }
}

</mosaic_0001>

<llo_original>
// kernel: enhanced_prediction_mlp.1
$region0: #{enhanced_prediction_mlp.1}
  #allocation0 [shape = 'u32[]', space=smem, size = 0x4, offset = 0x4, fixed_abs, tag = 'smem constant byte address 0x4 - core index']
  #allocation1 [shape = 'u32[144,128]{1,0:T(1,128)}', space=vmem, size = 0x12000, scoped, tag = 'internal scratch']
  %s0 = inlined_call_operand.hbm [shape: bf16[8,128], index: 0, kind: input, shape index: {}]
  %s1 = inlined_call_operand.hbm [shape: bf16[128,128], index: 1, kind: input, shape index: {}]
  %s2 = inlined_call_operand.hbm [shape: f32[1,128], index: 2, kind: input, shape index: {}]
  %s3 = inlined_call_operand.hbm [shape: bf16[128,128], index: 3, kind: input, shape index: {}]
  %s4 = inlined_call_operand.hbm [shape: f32[1,128], index: 4, kind: input, shape index: {}]
  %s5 = inlined_call_operand.hbm [shape: bf16[128,128], index: 5, kind: input, shape index: {}]
  %s6 = inlined_call_operand.hbm [shape: f32[1,128], index: 6, kind: input, shape index: {}]
  %s7 = inlined_call_operand.hbm [shape: bf16[128,128], index: 7, kind: input, shape index: {}]
  %s8 = inlined_call_operand.hbm [shape: f32[1,128], index: 8, kind: input, shape index: {}]
  %s9 = inlined_call_operand.hbm [shape: f32[8,128], index: 9, kind: output, shape index: {}]
  %s10 = sld [smem:[#allocation0]]
  $region82: #{enhanced_prediction_mlp.1} parent=0
    _
  %s12 = ssub.s32 1, %s10
  %s13 = scalar_select 0, %s12, %s10
  $region1: #{enhanced_prediction_mlp.1} parent=0
    #allocation2 [shape = 'u8[2048]{0}', space=vmem, size = 0x800, scoped, tag = 'input window, operand 0, single buffered']
    #allocation3 [shape = 's32[1]{0}', space=sflag, size = 0x4, scoped, tag = 'scoped memory for enhanced_prediction_mlp.1']
    #allocation4 [shape = 's32[1]{0}', space=sflag, size = 0x4, scoped, tag = 'scoped memory for enhanced_prediction_mlp.1']
    #allocation5 [shape = 'u8[32768]{0}', space=vmem, size = 0x8000, scoped, tag = 'input window, operand 1, single buffered']
    #allocation6 [shape = 's32[1]{0}', space=sflag, size = 0x4, scoped, tag = 'scoped memory for enhanced_prediction_mlp.1']
    #allocation7 [shape = 'u8[512]{0}', space=vmem, size = 0x400, scoped, tag = 'input window, operand 2, single buffered']
    #allocation8 [shape = 'u8[32768]{0}', space=vmem, size = 0x8000, scoped, tag = 'input window, operand 3, single buffered']
    #allocation9 [shape = 's32[1]{0}', space=sflag, size = 0x4, scoped, tag = 'scoped memory for enhanced_prediction_mlp.1']
    #allocation10 [shape = 'u8[512]{0}', space=vmem, size = 0x400, scoped, tag = 'input window, operand 4, single buffered']
    #allocation11 [shape = 'u8[32768]{0}', space=vmem, size = 0x8000, scoped, tag = 'input window, operand 5, single buffered']
    #allocation12 [shape = 's32[1]{0}', space=sflag, size = 0x4, scoped, tag = 'scoped memory for enhanced_prediction_mlp.1']
    #allocation13 [shape = 'u8[512]{0}', space=vmem, size = 0x400, scoped, tag = 'input window, operand 6, single buffered']
    #allocation14 [shape = 'u8[32768]{0}', space=vmem, size = 0x8000, scoped, tag = 'input window, operand 7, single buffered']
    #allocation15 [shape = 's32[1]{0}', space=sflag, size = 0x4, scoped, tag = 'scoped memory for enhanced_prediction_mlp.1']
    #allocation16 [shape = 'u8[512]{0}', space=vmem, size = 0x400, scoped, tag = 'input window, operand 8, single buffered']
    #allocation17 [shape = 'u8[4096]{0}', space=vmem, size = 0x1000, scoped, tag = 'output window, operand 0, single buffered']
    %14 = vsyncpa [#allocation3], 0
    %15 = vsyncpa [#allocation6], 0
    %16 = vsyncpa [#allocation9], 0
    %17 = vsyncpa [#allocation12], 0
    %18 = vsyncpa [#allocation15], 0
    %19 = vsyncpa [#allocation4], 0
    // Predicated region
    $region2: #{enhanced_prediction_mlp.1} parent=1 // pred_check
      _
    $region3: #{enhanced_prediction_mlp.1} parent=1 // pred_check_branch
      %21 = sbr.rel (0) target = $region5
    $region4: #{enhanced_prediction_mlp.1} parent=1 // pred_region
      %s23 = ssub.s32 64, 64
      %24 = vsyncadd [#allocation3], %s23
      %s26 = sshll.u32 [#allocation2], 4
      %s27 = int_to_ptr.vmem [resolvable:$true] %s26
      %29 = dma.hbm_to_vmem [thread:$0]  %s0, 64, %s27, [#allocation3]
    $region5: #{enhanced_prediction_mlp.1} parent=1 // pred_fallthru
      _
    // Predicated region
    $region6: #{enhanced_prediction_mlp.1} parent=1 // pred_check
      _
    $region7: #{enhanced_prediction_mlp.1} parent=1 // pred_check_branch
      %31 = sbr.rel (0) target = $region9
    $region8: #{enhanced_prediction_mlp.1} parent=1 // pred_region
      %s33 = ssub.s32 1024, 1024
      %34 = vsyncadd [#allocation6], %s33
      %s35 = sshll.u32 [#allocation5], 4
      %s36 = int_to_ptr.vmem [resolvable:$true] %s35
      %41 = dma.hbm_to_vmem [thread:$0]  %s1, 1024, %s36, [#allocation6], 64, 64, 4
    $region9: #{enhanced_prediction_mlp.1} parent=1 // pred_fallthru
      _
    // Predicated region
    $region10: #{enhanced_prediction_mlp.1} parent=1 // pred_check
      _
    $region11: #{enhanced_prediction_mlp.1} parent=1 // pred_check_branch
      %43 = sbr.rel (0) target = $region13
    $region12: #{enhanced_prediction_mlp.1} parent=1 // pred_region
      %s45 = ssub.s32 16, 16
      %46 = vsyncadd [#allocation6], %s45
      %s48 = sshll.u32 [#allocation7], 4
      %s49 = int_to_ptr.vmem [resolvable:$true] %s48
      %51 = dma.hbm_to_vmem [thread:$0]  %s2, 16, %s49, [#allocation6]
    $region13: #{enhanced_prediction_mlp.1} parent=1 // pred_fallthru
      _
    // Predicated region
    $region14: #{enhanced_prediction_mlp.1} parent=1 // pred_check
      _
    $region15: #{enhanced_prediction_mlp.1} parent=1 // pred_check_branch
      %53 = sbr.rel (0) target = $region17
    $region16: #{enhanced_prediction_mlp.1} parent=1 // pred_region
      %s55 = ssub.s32 1024, 1024
      %56 = vsyncadd [#allocation9], %s55
      %s57 = sshll.u32 [#allocation8], 4
      %s58 = int_to_ptr.vmem [resolvable:$true] %s57
      %63 = dma.hbm_to_vmem [thread:$0]  %s3, 1024, %s58, [#allocation9], 64, 64, 4
    $region17: #{enhanced_prediction_mlp.1} parent=1 // pred_fallthru
      _
    // Predicated region
    $region18: #{enhanced_prediction_mlp.1} parent=1 // pred_check
      _
    $region19: #{enhanced_prediction_mlp.1} parent=1 // pred_check_branch
      %65 = sbr.rel (0) target = $region21
    $region20: #{enhanced_prediction_mlp.1} parent=1 // pred_region
      %s67 = ssub.s32 16, 16
      %68 = vsyncadd [#allocation9], %s67
      %s70 = sshll.u32 [#allocation10], 4
      %s71 = int_to_ptr.vmem [resolvable:$true] %s70
      %73 = dma.hbm_to_vmem [thread:$0]  %s4, 16, %s71, [#allocation9]
    $region21: #{enhanced_prediction_mlp.1} parent=1 // pred_fallthru
      _
    // Predicated region
    $region22: #{enhanced_prediction_mlp.1} parent=1 // pred_check
      _
    $region23: #{enhanced_prediction_mlp.1} parent=1 // pred_check_branch
      %75 = sbr.rel (0) target = $region25
    $region24: #{enhanced_prediction_mlp.1} parent=1 // pred_region
      %s77 = ssub.s32 1024, 1024
      %78 = vsyncadd [#allocation12], %s77
      %s79 = sshll.u32 [#allocation11], 4
      %s80 = int_to_ptr.vmem [resolvable:$true] %s79
      %85 = dma.hbm_to_vmem [thread:$0]  %s5, 1024, %s80, [#allocation12], 64, 64, 4
    $region25: #{enhanced_prediction_mlp.1} parent=1 // pred_fallthru
      _
    // Predicated region
    $region26: #{enhanced_prediction_mlp.1} parent=1 // pred_check
      _
    $region27: #{enhanced_prediction_mlp.1} parent=1 // pred_check_branch
      %87 = sbr.rel (0) target = $region29
    $region28: #{enhanced_prediction_mlp.1} parent=1 // pred_region
      %s89 = ssub.s32 16, 16
      %90 = vsyncadd [#allocation12], %s89
      %s92 = sshll.u32 [#allocation13], 4
      %s93 = int_to_ptr.vmem [resolvable:$true] %s92
      %95 = dma.hbm_to_vmem [thread:$0]  %s6, 16, %s93, [#allocation12]
    $region29: #{enhanced_prediction_mlp.1} parent=1 // pred_fallthru
      _
    // Predicated region
    $region30: #{enhanced_prediction_mlp.1} parent=1 // pred_check
      _
    $region31: #{enhanced_prediction_mlp.1} parent=1 // pred_check_branch
      %97 = sbr.rel (0) target = $region33
    $region32: #{enhanced_prediction_mlp.1} parent=1 // pred_region
      %s99 = ssub.s32 1024, 1024
      %100 = vsyncadd [#allocation15], %s99
      %s101 = sshll.u32 [#allocation14], 4
      %s102 = int_to_ptr.vmem [resolvable:$true] %s101
      %107 = dma.hbm_to_vmem [thread:$0]  %s7, 1024, %s102, [#allocation15], 64, 64, 4
    $region33: #{enhanced_prediction_mlp.1} parent=1 // pred_fallthru
      _
    // Predicated region
    $region34: #{enhanced_prediction_mlp.1} parent=1 // pred_check
      _
    $region35: #{enhanced_prediction_mlp.1} parent=1 // pred_check_branch
      %109 = sbr.rel (0) target = $region37
    $region36: #{enhanced_prediction_mlp.1} parent=1 // pred_region
      %s111 = ssub.s32 16, 16
      %112 = vsyncadd [#allocation15], %s111
      %s114 = sshll.u32 [#allocation16], 4
      %s115 = int_to_ptr.vmem [resolvable:$true] %s114
      %117 = dma.hbm_to_vmem [thread:$0]  %s8, 16, %s115, [#allocation15]
    $region37: #{enhanced_prediction_mlp.1} parent=1 // pred_fallthru
      _
    // Predicated region
    $region38: #{enhanced_prediction_mlp.1} parent=1 // pred_check
      _
    $region39: #{enhanced_prediction_mlp.1} parent=1 // pred_check_branch
      %119 = sbr.rel (0) target = $region41
    $region40: #{enhanced_prediction_mlp.1} parent=1 // pred_region
      %120 = dma.done [#allocation3], 64
    $region41: #{enhanced_prediction_mlp.1} parent=1 // pred_fallthru
      _
    // Predicated region
    $region42: #{enhanced_prediction_mlp.1} parent=1 // pred_check
      _
    $region43: #{enhanced_prediction_mlp.1} parent=1 // pred_check_branch
      %122 = sbr.rel (0) target = $region45
    $region44: #{enhanced_prediction_mlp.1} parent=1 // pred_region
      %123 = dma.done [#allocation6], 1024
    $region45: #{enhanced_prediction_mlp.1} parent=1 // pred_fallthru
      _
    // Predicated region
    $region46: #{enhanced_prediction_mlp.1} parent=1 // pred_check
      _
    $region47: #{enhanced_prediction_mlp.1} parent=1 // pred_check_branch
      %125 = sbr.rel (0) target = $region49
    $region48: #{enhanced_prediction_mlp.1} parent=1 // pred_region
      %126 = dma.done [#allocation6], 16
    $region49: #{enhanced_prediction_mlp.1} parent=1 // pred_fallthru
      _
    // Predicated region
    $region50: #{enhanced_prediction_mlp.1} parent=1 // pred_check
      _
    $region51: #{enhanced_prediction_mlp.1} parent=1 // pred_check_branch
      %128 = sbr.rel (0) target = $region53
    $region52: #{enhanced_prediction_mlp.1} parent=1 // pred_region
      %129 = dma.done [#allocation9], 1024
    $region53: #{enhanced_prediction_mlp.1} parent=1 // pred_fallthru
      _
    // Predicated region
    $region54: #{enhanced_prediction_mlp.1} parent=1 // pred_check
      _
    $region55: #{enhanced_prediction_mlp.1} parent=1 // pred_check_branch
      %131 = sbr.rel (0) target = $region57
    $region56: #{enhanced_prediction_mlp.1} parent=1 // pred_region
      %132 = dma.done [#allocation9], 16
    $region57: #{enhanced_prediction_mlp.1} parent=1 // pred_fallthru
      _
    // Predicated region
    $region58: #{enhanced_prediction_mlp.1} parent=1 // pred_check
      _
    $region59: #{enhanced_prediction_mlp.1} parent=1 // pred_check_branch
      %134 = sbr.rel (0) target = $region61
    $region60: #{enhanced_prediction_mlp.1} parent=1 // pred_region
      %135 = dma.done [#allocation12], 1024
    $region61: #{enhanced_prediction_mlp.1} parent=1 // pred_fallthru
      _
    // Predicated region
    $region62: #{enhanced_prediction_mlp.1} parent=1 // pred_check
      _
    $region63: #{enhanced_prediction_mlp.1} parent=1 // pred_check_branch
      %137 = sbr.rel (0) target = $region65
    $region64: #{enhanced_prediction_mlp.1} parent=1 // pred_region
      %138 = dma.done [#allocation12], 16
    $region65: #{enhanced_prediction_mlp.1} parent=1 // pred_fallthru
      _
    // Predicated region
    $region66: #{enhanced_prediction_mlp.1} parent=1 // pred_check
      _
    $region67: #{enhanced_prediction_mlp.1} parent=1 // pred_check_branch
      %140 = sbr.rel (0) target = $region69
    $region68: #{enhanced_prediction_mlp.1} parent=1 // pred_region
      %141 = dma.done [#allocation15], 1024
    $region69: #{enhanced_prediction_mlp.1} parent=1 // pred_fallthru
      _
    // Predicated region
    $region70: #{enhanced_prediction_mlp.1} parent=1 // pred_check
      _
    $region71: #{enhanced_prediction_mlp.1} parent=1 // pred_check_branch
      %143 = sbr.rel (0) target = $region73
    $region72: #{enhanced_prediction_mlp.1} parent=1 // pred_region
      %144 = dma.done [#allocation15], 16
    $region73: #{enhanced_prediction_mlp.1} parent=1 // pred_fallthru
      _
    %v146 = vld [vmem:[#allocation2] sm:$0xf]
    %v147 = vld [vmem:[#allocation5] sm:$0xf]
    %v148 = vld [vmem:[#allocation5 + $0x4] sm:$0xf]
    %v149 = vld [vmem:[#allocation5 + $0x8] sm:$0xf]
    %v150 = vld [vmem:[#allocation5 + $0xc] sm:$0xf]
    %v151 = vld [vmem:[#allocation5 + $0x10] sm:$0xf]
    %v152 = vld [vmem:[#allocation5 + $0x14] sm:$0xf]
    %v153 = vld [vmem:[#allocation5 + $0x18] sm:$0xf]
    %v154 = vld [vmem:[#allocation5 + $0x1c] sm:$0xf]
    %v155 = vld [vmem:[#allocation5 + $0x20] sm:$0xf]
    %v156 = vld [vmem:[#allocation5 + $0x24] sm:$0xf]
    %v157 = vld [vmem:[#allocation5 + $0x28] sm:$0xf]
    %v158 = vld [vmem:[#allocation5 + $0x2c] sm:$0xf]
    %v159 = vld [vmem:[#allocation5 + $0x30] sm:$0xf]
    %v160 = vld [vmem:[#allocation5 + $0x34] sm:$0xf]
    %v161 = vld [vmem:[#allocation5 + $0x38] sm:$0xf]
    %v162 = vld [vmem:[#allocation5 + $0x3c] sm:$0xf]
    %v163 = vld [vmem:[#allocation7] sm:$0x1]
    %v165 = vlaneseq
    %v166 = vshrl.u32 %v165, 7
    %v167 = vsub.s32 0, %v166
    %v168 = vrot.slane %v163, %v167
    %v186 = vunpack.c.l.b16 %v147
    %v187 = vunpack.c.l.b16 %v148
    %v188 = vunpack.c.l.b16 %v149
    %v189 = vunpack.c.l.b16 %v150
    %v190 = vunpack.c.l.b16 %v151
    %v191 = vunpack.c.l.b16 %v152
    %v192 = vunpack.c.l.b16 %v153
    %v193 = vunpack.c.l.b16 %v154
    %v194 = vunpack.c.l.b16 %v155
    %v195 = vunpack.c.l.b16 %v156
    %v196 = vunpack.c.l.b16 %v157
    %v197 = vunpack.c.l.b16 %v158
    %v198 = vunpack.c.l.b16 %v159
    %v199 = vunpack.c.l.b16 %v160
    %v200 = vunpack.c.l.b16 %v161
    %v201 = vunpack.c.l.b16 %v162
    %v202 = vpack.c.b16 %v187, %v186
    %v203 = vpack.c.b16 %v189, %v188
    %v204 = vpack.c.b16 %v191, %v190
    %v205 = vpack.c.b16 %v193, %v192
    %v206 = vpack.c.b16 %v195, %v194
    %v207 = vpack.c.b16 %v197, %v196
    %v208 = vpack.c.b16 %v199, %v198
    %v209 = vpack.c.b16 %v201, %v200
    %218 = vmatprep.subr.bf16.mxu0 0
    %219 = vmatpush1.bf16.msra.mxu0 %v202
    %220 = vmatprep.subr.bf16.mxu0 0
    %221 = vmatpush1.bf16.msra.mxu0 %v203
    %222 = vmatprep.subr.bf16.mxu0 0
    %223 = vmatpush1.bf16.msra.mxu0 %v204
    %224 = vmatprep.subr.bf16.mxu0 0
    %225 = vmatpush1.bf16.msra.mxu0 %v205
    %226 = vmatprep.subr.bf16.mxu0 0
    %227 = vmatpush1.bf16.msra.mxu0 %v206
    %228 = vmatprep.subr.bf16.mxu0 0
    %229 = vmatpush1.bf16.msra.mxu0 %v207
    %230 = vmatprep.subr.bf16.mxu0 0
    %231 = vmatpush1.bf16.msra.mxu0 %v208
    %232 = vmatprep.subr.bf16.mxu0 0
    %233 = vmatpush1.bf16.msra.mxu0 %v209
    %234 = vmatprep.subr.bf16.mxu0 0
    %235 = vmatpush1.bf16.msra.mxu0 0
    %236 = vmatprep.subr.bf16.mxu0 0
    %237 = vmatpush1.bf16.msra.mxu0 0
    %238 = vmatprep.subr.bf16.mxu0 0
    %239 = vmatpush1.bf16.msra.mxu0 0
    %240 = vmatprep.subr.bf16.mxu0 0
    %241 = vmatpush1.bf16.msra.mxu0 0
    %242 = vmatprep.subr.bf16.mxu0 0
    %243 = vmatpush1.bf16.msra.mxu0 0
    %244 = vmatprep.subr.bf16.mxu0 0
    %245 = vmatpush1.bf16.msra.mxu0 0
    %246 = vmatprep.subr.bf16.mxu0 0
    %247 = vmatpush1.bf16.msra.mxu0 0
    %248 = vmatprep.subr.bf16.mxu0 0
    %249 = vmatpush1.bf16.msra.mxu0 0
    %250 = vmatprep.mubr.bf16.mxu0 0
    %251 = vmatmul.mubr.bf16.gmra.mrb[0].mxu0 %v146
    %v252 = vpop.f32.mrb[0].mxu0
    %v253 = vadd.f32 %v168, %v252
    %v254 = vpop.f32.mrb[0].mxu0
    %v255 = vpop.f32.mrb[0].mxu0
    %v256 = vpop.f32.mrb[0].mxu0
    %257 = vdwg.mxu0
    %v258 = vmax.f32 %v253, 0.0
    %v259 = vpack.c.bf16 %v258, %v258
    %v260 = vld [vmem:[#allocation8] sm:$0xf]
    %v261 = vld [vmem:[#allocation8 + $0x4] sm:$0xf]
    %v262 = vld [vmem:[#allocation8 + $0x8] sm:$0xf]
    %v263 = vld [vmem:[#allocation8 + $0xc] sm:$0xf]
    %v264 = vld [vmem:[#allocation8 + $0x10] sm:$0xf]
    %v265 = vld [vmem:[#allocation8 + $0x14] sm:$0xf]
    %v266 = vld [vmem:[#allocation8 + $0x18] sm:$0xf]
    %v267 = vld [vmem:[#allocation8 + $0x1c] sm:$0xf]
    %v268 = vld [vmem:[#allocation8 + $0x20] sm:$0xf]
    %v269 = vld [vmem:[#allocation8 + $0x24] sm:$0xf]
    %v270 = vld [vmem:[#allocation8 + $0x28] sm:$0xf]
    %v271 = vld [vmem:[#allocation8 + $0x2c] sm:$0xf]
    %v272 = vld [vmem:[#allocation8 + $0x30] sm:$0xf]
    %v273 = vld [vmem:[#allocation8 + $0x34] sm:$0xf]
    %v274 = vld [vmem:[#allocation8 + $0x38] sm:$0xf]
    %v275 = vld [vmem:[#allocation8 + $0x3c] sm:$0xf]
    %v276 = vld [vmem:[#allocation10] sm:$0x1]
    %v278 = vlaneseq
    %v279 = vshrl.u32 %v278, 7
    %v280 = vsub.s32 0, %v279
    %v281 = vrot.slane %v276, %v280
    %v299 = vunpack.c.l.b16 %v260
    %v300 = vunpack.c.l.b16 %v261
    %v301 = vunpack.c.l.b16 %v262
    %v302 = vunpack.c.l.b16 %v263
    %v303 = vunpack.c.l.b16 %v264
    %v304 = vunpack.c.l.b16 %v265
    %v305 = vunpack.c.l.b16 %v266
    %v306 = vunpack.c.l.b16 %v267
    %v307 = vunpack.c.l.b16 %v268
    %v308 = vunpack.c.l.b16 %v269
    %v309 = vunpack.c.l.b16 %v270
    %v310 = vunpack.c.l.b16 %v271
    %v311 = vunpack.c.l.b16 %v272
    %v312 = vunpack.c.l.b16 %v273
    %v313 = vunpack.c.l.b16 %v274
    %v314 = vunpack.c.l.b16 %v275
    %v315 = vpack.c.b16 %v300, %v299
    %v316 = vpack.c.b16 %v302, %v301
    %v317 = vpack.c.b16 %v304, %v303
    %v318 = vpack.c.b16 %v306, %v305
    %v319 = vpack.c.b16 %v308, %v307
    %v320 = vpack.c.b16 %v310, %v309
    %v321 = vpack.c.b16 %v312, %v311
    %v322 = vpack.c.b16 %v314, %v313
    %331 = vmatprep.subr.bf16.mxu0 0
    %332 = vmatpush1.bf16.msra.mxu0 %v315
    %333 = vmatprep.subr.bf16.mxu0 0
    %334 = vmatpush1.bf16.msra.mxu0 %v316
    %335 = vmatprep.subr.bf16.mxu0 0
    %336 = vmatpush1.bf16.msra.mxu0 %v317
    %337 = vmatprep.subr.bf16.mxu0 0
    %338 = vmatpush1.bf16.msra.mxu0 %v318
    %339 = vmatprep.subr.bf16.mxu0 0
    %340 = vmatpush1.bf16.msra.mxu0 %v319
    %341 = vmatprep.subr.bf16.mxu0 0
    %342 = vmatpush1.bf16.msra.mxu0 %v320
    %343 = vmatprep.subr.bf16.mxu0 0
    %344 = vmatpush1.bf16.msra.mxu0 %v321
    %345 = vmatprep.subr.bf16.mxu0 0
    %346 = vmatpush1.bf16.msra.mxu0 %v322
    %347 = vmatprep.subr.bf16.mxu0 0
    %348 = vmatpush1.bf16.msra.mxu0 0
    %349 = vmatprep.subr.bf16.mxu0 0
    %350 = vmatpush1.bf16.msra.mxu0 0
    %351 = vmatprep.subr.bf16.mxu0 0
    %352 = vmatpush1.bf16.msra.mxu0 0
    %353 = vmatprep.subr.bf16.mxu0 0
    %354 = vmatpush1.bf16.msra.mxu0 0
    %355 = vmatprep.subr.bf16.mxu0 0
    %356 = vmatpush1.bf16.msra.mxu0 0
    %357 = vmatprep.subr.bf16.mxu0 0
    %358 = vmatpush1.bf16.msra.mxu0 0
    %359 = vmatprep.subr.bf16.mxu0 0
    %360 = vmatpush1.bf16.msra.mxu0 0
    %361 = vmatprep.subr.bf16.mxu0 0
    %362 = vmatpush1.bf16.msra.mxu0 0
    %363 = vmatprep.mubr.bf16.mxu0 0
    %364 = vmatmul.mubr.bf16.gmra.mrb[0].mxu0 %v259
    %v365 = vpop.f32.mrb[0].mxu0
    %v366 = vadd.f32 %v281, %v365
    %v367 = vpop.f32.mrb[0].mxu0
    %v368 = vpop.f32.mrb[0].mxu0
    %v369 = vpop.f32.mrb[0].mxu0
    %370 = vdwg.mxu0
    %v371 = vmax.f32 %v366, 0.0
    %v372 = vpack.c.bf16 %v371, %v371
    %v373 = vld [vmem:[#allocation11] sm:$0xf]
    %v374 = vld [vmem:[#allocation11 + $0x4] sm:$0xf]
    %v375 = vld [vmem:[#allocation11 + $0x8] sm:$0xf]
    %v376 = vld [vmem:[#allocation11 + $0xc] sm:$0xf]
    %v377 = vld [vmem:[#allocation11 + $0x10] sm:$0xf]
    %v378 = vld [vmem:[#allocation11 + $0x14] sm:$0xf]
    %v379 = vld [vmem:[#allocation11 + $0x18] sm:$0xf]
    %v380 = vld [vmem:[#allocation11 + $0x1c] sm:$0xf]
    %v381 = vld [vmem:[#allocation11 + $0x20] sm:$0xf]
    %v382 = vld [vmem:[#allocation11 + $0x24] sm:$0xf]
    %v383 = vld [vmem:[#allocation11 + $0x28] sm:$0xf]
    %v384 = vld [vmem:[#allocation11 + $0x2c] sm:$0xf]
    %v385 = vld [vmem:[#allocation11 + $0x30] sm:$0xf]
    %v386 = vld [vmem:[#allocation11 + $0x34] sm:$0xf]
    %v387 = vld [vmem:[#allocation11 + $0x38] sm:$0xf]
    %v388 = vld [vmem:[#allocation11 + $0x3c] sm:$0xf]
    %v389 = vld [vmem:[#allocation13] sm:$0x1]
    %v391 = vlaneseq
    %v392 = vshrl.u32 %v391, 7
    %v393 = vsub.s32 0, %v392
    %v394 = vrot.slane %v389, %v393
    %v412 = vunpack.c.l.b16 %v373
    %v413 = vunpack.c.l.b16 %v374
    %v414 = vunpack.c.l.b16 %v375
    %v415 = vunpack.c.l.b16 %v376
    %v416 = vunpack.c.l.b16 %v377
    %v417 = vunpack.c.l.b16 %v378
    %v418 = vunpack.c.l.b16 %v379
    %v419 = vunpack.c.l.b16 %v380
    %v420 = vunpack.c.l.b16 %v381
    %v421 = vunpack.c.l.b16 %v382
    %v422 = vunpack.c.l.b16 %v383
    %v423 = vunpack.c.l.b16 %v384
    %v424 = vunpack.c.l.b16 %v385
    %v425 = vunpack.c.l.b16 %v386
    %v426 = vunpack.c.l.b16 %v387
    %v427 = vunpack.c.l.b16 %v388
    %v428 = vpack.c.b16 %v413, %v412
    %v429 = vpack.c.b16 %v415, %v414
    %v430 = vpack.c.b16 %v417, %v416
    %v431 = vpack.c.b16 %v419, %v418
    %v432 = vpack.c.b16 %v421, %v420
    %v433 = vpack.c.b16 %v423, %v422
    %v434 = vpack.c.b16 %v425, %v424
    %v435 = vpack.c.b16 %v427, %v426
    %444 = vmatprep.subr.bf16.mxu0 0
    %445 = vmatpush1.bf16.msra.mxu0 %v428
    %446 = vmatprep.subr.bf16.mxu0 0
    %447 = vmatpush1.bf16.msra.mxu0 %v429
    %448 = vmatprep.subr.bf16.mxu0 0
    %449 = vmatpush1.bf16.msra.mxu0 %v430
    %450 = vmatprep.subr.bf16.mxu0 0
    %451 = vmatpush1.bf16.msra.mxu0 %v431
    %452 = vmatprep.subr.bf16.mxu0 0
    %453 = vmatpush1.bf16.msra.mxu0 %v432
    %454 = vmatprep.subr.bf16.mxu0 0
    %455 = vmatpush1.bf16.msra.mxu0 %v433
    %456 = vmatprep.subr.bf16.mxu0 0
    %457 = vmatpush1.bf16.msra.mxu0 %v434
    %458 = vmatprep.subr.bf16.mxu0 0
    %459 = vmatpush1.bf16.msra.mxu0 %v435
    %460 = vmatprep.subr.bf16.mxu0 0
    %461 = vmatpush1.bf16.msra.mxu0 0
    %462 = vmatprep.subr.bf16.mxu0 0
    %463 = vmatpush1.bf16.msra.mxu0 0
    %464 = vmatprep.subr.bf16.mxu0 0
    %465 = vmatpush1.bf16.msra.mxu0 0
    %466 = vmatprep.subr.bf16.mxu0 0
    %467 = vmatpush1.bf16.msra.mxu0 0
    %468 = vmatprep.subr.bf16.mxu0 0
    %469 = vmatpush1.bf16.msra.mxu0 0
    %470 = vmatprep.subr.bf16.mxu0 0
    %471 = vmatpush1.bf16.msra.mxu0 0
    %472 = vmatprep.subr.bf16.mxu0 0
    %473 = vmatpush1.bf16.msra.mxu0 0
    %474 = vmatprep.subr.bf16.mxu0 0
    %475 = vmatpush1.bf16.msra.mxu0 0
    %476 = vmatprep.mubr.bf16.mxu0 0
    %477 = vmatmul.mubr.bf16.gmra.mrb[0].mxu0 %v372
    %v478 = vpop.f32.mrb[0].mxu0
    %v479 = vadd.f32 %v394, %v478
    %v480 = vpop.f32.mrb[0].mxu0
    %v481 = vpop.f32.mrb[0].mxu0
    %v482 = vpop.f32.mrb[0].mxu0
    %483 = vdwg.mxu0
    %v484 = vmax.f32 %v479, 0.0
    %v485 = vpack.c.bf16 %v484, %v484
    %v486 = vld [vmem:[#allocation14] sm:$0xf]
    %v487 = vld [vmem:[#allocation14 + $0x4] sm:$0xf]
    %v488 = vld [vmem:[#allocation14 + $0x8] sm:$0xf]
    %v489 = vld [vmem:[#allocation14 + $0xc] sm:$0xf]
    %v490 = vld [vmem:[#allocation14 + $0x10] sm:$0xf]
    %v491 = vld [vmem:[#allocation14 + $0x14] sm:$0xf]
    %v492 = vld [vmem:[#allocation14 + $0x18] sm:$0xf]
    %v493 = vld [vmem:[#allocation14 + $0x1c] sm:$0xf]
    %v494 = vld [vmem:[#allocation14 + $0x20] sm:$0xf]
    %v495 = vld [vmem:[#allocation14 + $0x24] sm:$0xf]
    %v496 = vld [vmem:[#allocation14 + $0x28] sm:$0xf]
    %v497 = vld [vmem:[#allocation14 + $0x2c] sm:$0xf]
    %v498 = vld [vmem:[#allocation14 + $0x30] sm:$0xf]
    %v499 = vld [vmem:[#allocation14 + $0x34] sm:$0xf]
    %v500 = vld [vmem:[#allocation14 + $0x38] sm:$0xf]
    %v501 = vld [vmem:[#allocation14 + $0x3c] sm:$0xf]
    %v502 = vld [vmem:[#allocation16] sm:$0x1]
    %v504 = vlaneseq
    %v505 = vshrl.u32 %v504, 7
    %v506 = vsub.s32 0, %v505
    %v507 = vrot.slane %v502, %v506
    %v525 = vunpack.c.l.b16 %v486
    %v526 = vunpack.c.l.b16 %v487
    %v527 = vunpack.c.l.b16 %v488
    %v528 = vunpack.c.l.b16 %v489
    %v529 = vunpack.c.l.b16 %v490
    %v530 = vunpack.c.l.b16 %v491
    %v531 = vunpack.c.l.b16 %v492
    %v532 = vunpack.c.l.b16 %v493
    %v533 = vunpack.c.l.b16 %v494
    %v534 = vunpack.c.l.b16 %v495
    %v535 = vunpack.c.l.b16 %v496
    %v536 = vunpack.c.l.b16 %v497
    %v537 = vunpack.c.l.b16 %v498
    %v538 = vunpack.c.l.b16 %v499
    %v539 = vunpack.c.l.b16 %v500
    %v540 = vunpack.c.l.b16 %v501
    %v541 = vpack.c.b16 %v526, %v525
    %v542 = vpack.c.b16 %v528, %v527
    %v543 = vpack.c.b16 %v530, %v529
    %v544 = vpack.c.b16 %v532, %v531
    %v545 = vpack.c.b16 %v534, %v533
    %v546 = vpack.c.b16 %v536, %v535
    %v547 = vpack.c.b16 %v538, %v537
    %v548 = vpack.c.b16 %v540, %v539
    %557 = vmatprep.subr.bf16.mxu0 0
    %558 = vmatpush1.bf16.msra.mxu0 %v541
    %559 = vmatprep.subr.bf16.mxu0 0
    %560 = vmatpush1.bf16.msra.mxu0 %v542
    %561 = vmatprep.subr.bf16.mxu0 0
    %562 = vmatpush1.bf16.msra.mxu0 %v543
    %563 = vmatprep.subr.bf16.mxu0 0
    %564 = vmatpush1.bf16.msra.mxu0 %v544
    %565 = vmatprep.subr.bf16.mxu0 0
    %566 = vmatpush1.bf16.msra.mxu0 %v545
    %567 = vmatprep.subr.bf16.mxu0 0
    %568 = vmatpush1.bf16.msra.mxu0 %v546
    %569 = vmatprep.subr.bf16.mxu0 0
    %570 = vmatpush1.bf16.msra.mxu0 %v547
    %571 = vmatprep.subr.bf16.mxu0 0
    %572 = vmatpush1.bf16.msra.mxu0 %v548
    %573 = vmatprep.subr.bf16.mxu0 0
    %574 = vmatpush1.bf16.msra.mxu0 0
    %575 = vmatprep.subr.bf16.mxu0 0
    %576 = vmatpush1.bf16.msra.mxu0 0
    %577 = vmatprep.subr.bf16.mxu0 0
    %578 = vmatpush1.bf16.msra.mxu0 0
    %579 = vmatprep.subr.bf16.mxu0 0
    %580 = vmatpush1.bf16.msra.mxu0 0
    %581 = vmatprep.subr.bf16.mxu0 0
    %582 = vmatpush1.bf16.msra.mxu0 0
    %583 = vmatprep.subr.bf16.mxu0 0
    %584 = vmatpush1.bf16.msra.mxu0 0
    %585 = vmatprep.subr.bf16.mxu0 0
    %586 = vmatpush1.bf16.msra.mxu0 0
    %587 = vmatprep.subr.bf16.mxu0 0
    %588 = vmatpush1.bf16.msra.mxu0 0
    %589 = vmatprep.mubr.bf16.mxu0 0
    %590 = vmatmul.mubr.bf16.gmra.mrb[0].mxu0 %v485
    %v591 = vpop.f32.mrb[0].mxu0
    %v592 = vadd.f32 %v507, %v591
    %v593 = vpop.f32.mrb[0].mxu0
    %v594 = vpop.f32.mrb[0].mxu0
    %v595 = vpop.f32.mrb[0].mxu0
    %596 = vdwg.mxu0
    %597 = vst [vmem:[#allocation17] sm:$0xff] %v592
    // Predicated region
    $region74: #{enhanced_prediction_mlp.1} parent=1 // pred_check
      _
    $region75: #{enhanced_prediction_mlp.1} parent=1 // pred_check_branch
      %599 = sbr.rel (0) target = $region77
    $region76: #{enhanced_prediction_mlp.1} parent=1 // pred_region
      %s601 = ssub.s32 128, 128
      %602 = vsyncadd [#allocation4], %s601
      %s604 = sshll.u32 [#allocation17], 4
      %s605 = int_to_ptr.vmem [resolvable:$true] %s604
      %607 = dma.vmem_to_hbm [thread:$0]  %s605, 128, %s9, [#allocation4]
    $region77: #{enhanced_prediction_mlp.1} parent=1 // pred_fallthru
      _
    // Predicated region
    $region78: #{enhanced_prediction_mlp.1} parent=1 // pred_check
      _
    $region79: #{enhanced_prediction_mlp.1} parent=1 // pred_check_branch
      %609 = sbr.rel (0) target = $region81
    $region80: #{enhanced_prediction_mlp.1} parent=1 // pred_region
      %610 = dma.done [#allocation4], 128
    $region81: #{enhanced_prediction_mlp.1} parent=1 // pred_fallthru
      _
    %611 = vsyncpa [#allocation3], 1
    %612 = vsyncpa [#allocation6], 1
    %613 = vsyncpa [#allocation9], 1
    %614 = vsyncpa [#allocation12], 1
    %615 = vsyncpa [#allocation15], 1
    %616 = vsyncpa [#allocation4], 1

</llo_original>
